<compile_context>
chip_gen: v7x
topology: tpu7x:2x2x1
jax: 0.10.0
libtpu: 0.0.40
codegen_flags: <defaults>
</compile_context>

<pallas_src>
import functools
import math

import jax
import jax.numpy as jnp
from jax.experimental import pallas as pl
from jax.experimental.pallas import tpu as pltpu


def _round_up(x, k):
    return (x + k - 1) // k * k


def prepare_recon_decoder_weights(wu, wv, n, m, r, dtype=jnp.bfloat16):
    """One-off parameter prep -> expanded, fused weight.

    wu: (n*r, H) == torch U_proj.weight;  wv: (m*r, H) == torch V_proj.weight.
    Returns (H, 2*r*n*m) with
      column [k*n*m + i*m + j]           = wu[i*r + k, :]        (U, repeated along m)
      column [(r+k)*n*m + i*m + j]       = wv[j*r + k, :] / r    (V, tiled along n)
    so recon[t, i*m+j] = sum_k UV[t, k*nm + i*m+j] * UV[t, (r+k)*nm + i*m+j].

    NOTE (v5e): the expansion multiplies MXU columns by ~2*n*m/(n+m); on v5e at
    very large H this can push the (otherwise HBM-bound) kernel past the MXU
    roofline -- prefer a non-expanded weight + in-kernel broadcast epilogue
    there.  v6e / v7x absorb the expansion for free.
    """
    H = wu.shape[1]
    nm = n * m
    wu_c = wu.T.reshape(H, n, r).transpose(0, 2, 1)          # (H, r, n)
    wv_c = wv.T.reshape(H, m, r).transpose(0, 2, 1)          # (H, r, m)
    wu_exp = jnp.broadcast_to(wu_c[:, :, :, None], (H, r, n, m)).reshape(H, r * nm)
    wv_exp = jnp.broadcast_to(wv_c[:, :, None, :], (H, r, n, m)).reshape(H, r * nm)
    wv_exp = wv_exp * (1.0 / r)
    return jnp.concatenate([wu_exp, wv_exp], axis=1).astype(dtype)


def _epilogue(uv, nm, r):
    # uv: (rows, 2*r*nm) f32.  Lane-dense 2-D multiply-accumulate over rank.
    acc = uv[:, 0:nm] * uv[:, r * nm:(r + 1) * nm]
    for k in range(1, r):
        acc = acc + uv[:, k * nm:(k + 1) * nm] * uv[:, (r + k) * nm:(r + k + 1) * nm]
    return acc


def _recon_kernel_plain(h_ref, w_ref, out_ref, *, nm, r):
    # h_ref: (TM, H); w_ref: (H, 2*r*nm) bf16; out_ref: (TM, nm)
    h = h_ref[...]
    if h.dtype != jnp.bfloat16:
        h = h.astype(jnp.bfloat16)
    uv = jnp.dot(h, w_ref[...], preferred_element_type=jnp.float32)
    out_ref[...] = _epilogue(uv, nm, r).astype(out_ref.dtype)


def _recon_kernel_packed(h_ref, w_ref, out_ref, *, nm, r, rpp):
    # h_ref: (TM, H); out_ref: (TM//rpp, 128) with rpp = 128 // nm logical rows
    # packed per 128-lane row (row-major packing of the logical (BA, nm) output,
    # so the HBM writeback DMA is fully dense instead of nm-lane masked).
    tm = h_ref.shape[0]
    rows = tm // rpp
    for p in range(rpp):
        # strided sublane load: logical rows p, p+rpp, p+2*rpp, ...
        hp = h_ref[pl.ds(p, rows, rpp), :]
        if hp.dtype != jnp.bfloat16:
            hp = hp.astype(jnp.bfloat16)
        uv = jnp.dot(hp, w_ref[...], preferred_element_type=jnp.float32)
        out_ref[:, p * nm:(p + 1) * nm] = _epilogue(uv, nm, r).astype(out_ref.dtype)


def _derive_tile_rows(BA, H, ncols, nm, h_itemsize, out_itemsize):
    """Row tile TM + scoped-VMEM limit from the actual chip's VMEM capacity."""
    try:
        phys = int(pltpu.get_tpu_info().vmem_capacity_bytes)
    except Exception:
        phys = 64 * 1024 * 1024            # v7x has the smallest VMEM -> safe floor
    budget = phys // 2                     # keep ~50% headroom for compiler scratch

    w_bytes = 2 * H * ncols * 2            # fused bf16 weight, worst-case double-buffered

    def tile_bytes(tm):
        return (2 * tm * H * h_itemsize                    # h double-buffer
                + (tm * H * 2 if h_itemsize > 2 else 0)    # in-kernel bf16 copy (f32 h only)
                + tm * ncols * 4                           # uv (f32)
                + tm * nm * 4                              # acc (f32)
                + 2 * tm * max(nm, 128) * out_itemsize)    # out double-buffer (lane-padded)

    tm = 1024                              # >=512-row tiles measured near the HBM roofline
    while tm > 8 and w_bytes + tile_bytes(tm) > budget:
        tm //= 2
    tm = min(tm, _round_up(BA, 8))
    if tm < BA and tm % 16:                # keep sub-32-bit blocks sublane-aligned
        tm = 16
    vmem_limit = int(min(phys * 3 // 4,
                         max(32 * 1024 * 1024, 2 * (w_bytes + tile_bytes(tm)))))
    return tm, vmem_limit


def recon_decoder_forward(h, w_fused, n, m, r, *, out_dtype=None):
    """h: (B, A, H) (bf16 preferred, f32 accepted); w_fused from prepare_recon_decoder_weights."""
    B, A, H = h.shape
    BA, nm = B * A, n * m
    ncols = 2 * r * nm
    assert r >= 1 and w_fused.shape == (H, ncols)
    out_dtype = h.dtype if out_dtype is None else out_dtype

    h2 = h.reshape(BA, H)                  # free row-major reshape; no jnp.pad of h

    TM, vmem_limit = _derive_tile_rows(BA, H, ncols, nm,
                                       jnp.dtype(h.dtype).itemsize,
                                       jnp.dtype(out_dtype).itemsize)

    def run(kernel_fn, out_shape, out_spec):
        return pl.pallas_call(
            kernel_fn,
            out_shape=out_shape,
            grid_spec=pltpu.PrefetchScalarGridSpec(
                num_scalar_prefetch=0,
                grid=(pl.cdiv(BA, TM),),   # masked tail instead of wrapper-side padding
                in_specs=[
                    pl.BlockSpec((TM, H), lambda i: (i, 0)),       # streamed h row tiles
                    # Constant index_map -> weight stays resident across steps.
                    # (pipeline_mode=pl.Buffered(1) would also drop its 2nd buffer.)
                    pl.BlockSpec((H, ncols), lambda i: (0, 0)),
                ],
                out_specs=out_spec,
            ),
            compiler_params=pltpu.CompilerParams(
                # Independent row tiles; on v7x confirm both TensorCores are busy
                # (switch to CORE_PARALLEL / core_map if the axis is not split).
                dimension_semantics=("parallel",),
                vmem_limit_bytes=vmem_limit,
            ),
        )(h2, w_fused)

    # Lane-dense packed output when nm < 128 (pack 128//nm logical rows per row).
    sub_q = 8 * (4 // jnp.dtype(out_dtype).itemsize)
    can_pack = (nm < 128 and 128 % nm == 0 and BA % TM == 0
                and TM % (128 // nm) == 0
                and ((TM * nm // 128) % sub_q == 0 or TM == BA))
    if can_pack:
        try:
            out = run(
                functools.partial(_recon_kernel_packed, nm=nm, r=r, rpp=128 // nm),
                jax.ShapeDtypeStruct((BA * nm // 128, 128), out_dtype),
                pl.BlockSpec((TM * nm // 128, 128), lambda i: (i, 0)),
            )
            return out.reshape(B, A, nm)   # free bitcast back to the logical layout
        except Exception:
            pass  # strided-sublane packing unavailable on this compiler build -> plain layout

    out = run(
        functools.partial(_recon_kernel_plain, nm=nm, r=r),
        jax.ShapeDtypeStruct((BA, nm), out_dtype),
        pl.BlockSpec((TM, nm), lambda i: (i, 0)),
    )
    return out.reshape(B, A, nm)


def _reference(h_f32, wu, wv, n, m, r):
    """Pure-JAX f32 reference matching the PyTorch module."""
    B, A, H = h_f32.shape
    U = (h_f32 @ wu.T).reshape(B, A, n, r)
    V = (h_f32 @ wv.T).reshape(B, A, m, r)
    recon = jnp.einsum("bank,bamk->banm", U, V) / r
    return recon.reshape(B, A, n * m)


if __name__ == "__main__":
    # Shapes consistent with the module: batch=2, num_agents=4, hidden=32, n=m=8.
    B, A, H = 2, 4, 32
    n, m = 8, 8
    maxrank = min(n // 2, m // 2)          # 4

    key = jax.random.PRNGKey(0)
    k_h, k_u, k_v = jax.random.split(key, 3)

    # Producer emits bf16 activations (halves the dominant HBM read stream).
    h = jax.random.normal(k_h, (B, A, H), jnp.float32).astype(jnp.bfloat16)
    # PyTorch Linear weights are (out_features, in_features).
    bound = 1.0 / math.sqrt(H)
    wu = jax.random.uniform(k_u, (n * maxrank, H), jnp.float32, -bound, bound)
    wv = jax.random.uniform(k_v, (m * maxrank, H), jnp.float32, -bound, bound)

    w_fused = prepare_recon_decoder_weights(wu, wv, n, m, maxrank)

    out = recon_decoder_forward(h, w_fused, n, m, maxrank)
    out = jax.block_until_ready(out)

    ref = _reference(h.astype(jnp.float32), wu, wv, n, m, maxrank)
    assert out.shape == (B, A, n * m)
    err = float(jnp.max(jnp.abs(out.astype(jnp.float32) - ref)))
    # bf16 weights / activations / output vs the pure-f32 reference.
    assert jnp.allclose(out.astype(jnp.float32), ref, atol=3e-2, rtol=3e-2), err
    print("KERNEL_OK")
</pallas_src>

<mosaic_0001>
module attributes {stable_mosaic.version = 11 : i64} {
  func.func @_recon_kernel_packed(%arg0: i32, %arg1: memref<8x32xbf16, #tpu.memory_space<vmem>>, %arg2: memref<32x512xbf16, #tpu.memory_space<vmem>>, %arg3: memref<4x128xbf16, #tpu.memory_space<vmem>>) attributes {dimension_semantics = [#tpu.dimension_semantics<parallel>], iteration_bounds = array<i64: 1>, scalar_prefetch = 0 : i64, scratch_operands = 0 : i64, tpu.core_type = #tpu.core_type<tc>, window_params = [{transform_indices = @transform_0, window_bounds = array<i64: 8, 32>}, {pipeline_mode = #tpu.pipeline_mode<synchronous>, transform_indices = @transform_1, window_bounds = array<i64: 32, 512>}, {transform_indices = @transform_2, window_bounds = array<i64: 4, 128>}]} {
    %c0 = arith.constant 0 : index
    %c0_0 = arith.constant 0 : index
    %0 = tpu.strided_load %arg1[%c0, %c0_0] {strides = array<i32: 2, 1>} : memref<8x32xbf16, #tpu.memory_space<vmem>>, vector<4x32xbf16>
    %c0_1 = arith.constant 0 : index
    %c0_2 = arith.constant 0 : index
    %1 = vector.load %arg2[%c0_1, %c0_2] : memref<32x512xbf16, #tpu.memory_space<vmem>>, vector<32x512xbf16>
    %cst = arith.constant dense<0.000000e+00> : vector<4x512xf32>
    %2 = tpu.matmul %0, %1, %cst {dimension_numbers = #tpu.dot_dimension_numbers<[1], [0], [0], [1], [0, 0, 1, 1], [], []>} : vector<4x32xbf16>, vector<32x512xbf16>, vector<4x512xf32> -> vector<4x512xf32>
    %3 = vector.extract_strided_slice %2 {offsets = [0, 0], sizes = [4, 64], strides = [1, 1]} : vector<4x512xf32> to vector<4x64xf32>
    %4 = vector.extract_strided_slice %2 {offsets = [0, 256], sizes = [4, 64], strides = [1, 1]} : vector<4x512xf32> to vector<4x64xf32>
    %5 = arith.mulf %3, %4 : vector<4x64xf32>
    %6 = vector.extract_strided_slice %2 {offsets = [0, 64], sizes = [4, 64], strides = [1, 1]} : vector<4x512xf32> to vector<4x64xf32>
    %7 = vector.extract_strided_slice %2 {offsets = [0, 320], sizes = [4, 64], strides = [1, 1]} : vector<4x512xf32> to vector<4x64xf32>
    %8 = arith.mulf %6, %7 : vector<4x64xf32>
    %9 = arith.addf %5, %8 : vector<4x64xf32>
    %10 = vector.extract_strided_slice %2 {offsets = [0, 128], sizes = [4, 64], strides = [1, 1]} : vector<4x512xf32> to vector<4x64xf32>
    %11 = vector.extract_strided_slice %2 {offsets = [0, 384], sizes = [4, 64], strides = [1, 1]} : vector<4x512xf32> to vector<4x64xf32>
    %12 = arith.mulf %10, %11 : vector<4x64xf32>
    %13 = arith.addf %9, %12 : vector<4x64xf32>
    %14 = vector.extract_strided_slice %2 {offsets = [0, 192], sizes = [4, 64], strides = [1, 1]} : vector<4x512xf32> to vector<4x64xf32>
    %15 = vector.extract_strided_slice %2 {offsets = [0, 448], sizes = [4, 64], strides = [1, 1]} : vector<4x512xf32> to vector<4x64xf32>
    %16 = arith.mulf %14, %15 : vector<4x64xf32>
    %17 = arith.addf %13, %16 : vector<4x64xf32>
    %18 = arith.truncf %17 : vector<4x64xf32> to vector<4x64xbf16>
    %c0_3 = arith.constant 0 : index
    %c0_4 = arith.constant 0 : index
    %19 = vector.load %arg3[%c0_3, %c0_4] : memref<4x128xbf16, #tpu.memory_space<vmem>>, vector<4x64xbf16>
    tpu.vector_store %arg3[%c0_3, %c0_4], %18 {strides = array<i32>} : memref<4x128xbf16, #tpu.memory_space<vmem>>, vector<4x64xbf16>,
    %c1 = arith.constant 1 : index
    %c0_5 = arith.constant 0 : index
    %20 = tpu.strided_load %arg1[%c1, %c0_5] {strides = array<i32: 2, 1>} : memref<8x32xbf16, #tpu.memory_space<vmem>>, vector<4x32xbf16>
    %c0_6 = arith.constant 0 : index
    %c0_7 = arith.constant 0 : index
    %21 = vector.load %arg2[%c0_6, %c0_7] : memref<32x512xbf16, #tpu.memory_space<vmem>>, vector<32x512xbf16>
    %cst_8 = arith.constant dense<0.000000e+00> : vector<4x512xf32>
    %22 = tpu.matmul %20, %21, %cst_8 {dimension_numbers = #tpu.dot_dimension_numbers<[1], [0], [0], [1], [0, 0, 1, 1], [], []>} : vector<4x32xbf16>, vector<32x512xbf16>, vector<4x512xf32> -> vector<4x512xf32>
    %23 = vector.extract_strided_slice %22 {offsets = [0, 0], sizes = [4, 64], strides = [1, 1]} : vector<4x512xf32> to vector<4x64xf32>
    %24 = vector.extract_strided_slice %22 {offsets = [0, 256], sizes = [4, 64], strides = [1, 1]} : vector<4x512xf32> to vector<4x64xf32>
    %25 = arith.mulf %23, %24 : vector<4x64xf32>
    %26 = vector.extract_strided_slice %22 {offsets = [0, 64], sizes = [4, 64], strides = [1, 1]} : vector<4x512xf32> to vector<4x64xf32>
    %27 = vector.extract_strided_slice %22 {offsets = [0, 320], sizes = [4, 64], strides = [1, 1]} : vector<4x512xf32> to vector<4x64xf32>
    %28 = arith.mulf %26, %27 : vector<4x64xf32>
    %29 = arith.addf %25, %28 : vector<4x64xf32>
    %30 = vector.extract_strided_slice %22 {offsets = [0, 128], sizes = [4, 64], strides = [1, 1]} : vector<4x512xf32> to vector<4x64xf32>
    %31 = vector.extract_strided_slice %22 {offsets = [0, 384], sizes = [4, 64], strides = [1, 1]} : vector<4x512xf32> to vector<4x64xf32>
    %32 = arith.mulf %30, %31 : vector<4x64xf32>
    %33 = arith.addf %29, %32 : vector<4x64xf32>
    %34 = vector.extract_strided_slice %22 {offsets = [0, 192], sizes = [4, 64], strides = [1, 1]} : vector<4x512xf32> to vector<4x64xf32>
    %35 = vector.extract_strided_slice %22 {offsets = [0, 448], sizes = [4, 64], strides = [1, 1]} : vector<4x512xf32> to vector<4x64xf32>
    %36 = arith.mulf %34, %35 : vector<4x64xf32>
    %37 = arith.addf %33, %36 : vector<4x64xf32>
    %38 = arith.truncf %37 : vector<4x64xf32> to vector<4x64xbf16>
    %c0_9 = arith.constant 0 : index
    %c64 = arith.constant 64 : index
    %39 = vector.load %arg3[%c0_9, %c64] : memref<4x128xbf16, #tpu.memory_space<vmem>>, vector<4x64xbf16>
    tpu.vector_store %arg3[%c0_9, %c64], %38 {strides = array<i32>} : memref<4x128xbf16, #tpu.memory_space<vmem>>, vector<4x64xbf16>,
    return
  }
  func.func @transform_0(%arg0: i32) -> (i32, i32) {
    %c0_i32 = arith.constant 0 : i32
    %c0_i32_0 = arith.constant 0 : i32
    return %arg0, %c0_i32 : i32, i32
  }
  func.func @transform_1(%arg0: i32) -> (i32, i32) {
    %c0_i32 = arith.constant 0 : i32
    %c0_i32_0 = arith.constant 0 : i32
    %c0_i32_1 = arith.constant 0 : i32
    return %c0_i32, %c0_i32_0 : i32, i32
  }
  func.func @transform_2(%arg0: i32) -> (i32, i32) {
    %c0_i32 = arith.constant 0 : i32
    %c0_i32_0 = arith.constant 0 : i32
    return %arg0, %c0_i32 : i32, i32
  }
}

module attributes {stable_mosaic.version = 11 : i64} {
  func.func @_recon_kernel_plain(%arg0: i32, %arg1: memref<8x32xbf16, #tpu.memory_space<vmem>>, %arg2: memref<32x512xbf16, #tpu.memory_space<vmem>>, %arg3: memref<8x64xbf16, #tpu.memory_space<vmem>>) attributes {dimension_semantics = [#tpu.dimension_semantics<parallel>], iteration_bounds = array<i64: 1>, scalar_prefetch = 0 : i64, scratch_operands = 0 : i64, tpu.core_type = #tpu.core_type<tc>, window_params = [{transform_indices = @transform_0, window_bounds = array<i64: 8, 32>}, {pipeline_mode = #tpu.pipeline_mode<synchronous>, transform_indices = @transform_1, window_bounds = array<i64: 32, 512>}, {transform_indices = @transform_2, window_bounds = array<i64: 8, 64>}]} {
    %c0 = arith.constant 0 : index
    %c0_0 = arith.constant 0 : index
    %0 = vector.load %arg1[%c0, %c0_0] : memref<8x32xbf16, #tpu.memory_space<vmem>>, vector<8x32xbf16>
    %c0_1 = arith.constant 0 : index
    %c0_2 = arith.constant 0 : index
    %1 = vector.load %arg2[%c0_1, %c0_2] : memref<32x512xbf16, #tpu.memory_space<vmem>>, vector<32x512xbf16>
    %cst = arith.constant dense<0.000000e+00> : vector<8x512xf32>
    %2 = tpu.matmul %0, %1, %cst {dimension_numbers = #tpu.dot_dimension_numbers<[1], [0], [0], [1], [0, 0, 1, 1], [], []>} : vector<8x32xbf16>, vector<32x512xbf16>, vector<8x512xf32> -> vector<8x512xf32>
    %3 = vector.extract_strided_slice %2 {offsets = [0, 0], sizes = [8, 64], strides = [1, 1]} : vector<8x512xf32> to vector<8x64xf32>
    %4 = vector.extract_strided_slice %2 {offsets = [0, 256], sizes = [8, 64], strides = [1, 1]} : vector<8x512xf32> to vector<8x64xf32>
    %5 = arith.mulf %3, %4 : vector<8x64xf32>
    %6 = vector.extract_strided_slice %2 {offsets = [0, 64], sizes = [8, 64], strides = [1, 1]} : vector<8x512xf32> to vector<8x64xf32>
    %7 = vector.extract_strided_slice %2 {offsets = [0, 320], sizes = [8, 64], strides = [1, 1]} : vector<8x512xf32> to vector<8x64xf32>
    %8 = arith.mulf %6, %7 : vector<8x64xf32>
    %9 = arith.addf %5, %8 : vector<8x64xf32>
    %10 = vector.extract_strided_slice %2 {offsets = [0, 128], sizes = [8, 64], strides = [1, 1]} : vector<8x512xf32> to vector<8x64xf32>
    %11 = vector.extract_strided_slice %2 {offsets = [0, 384], sizes = [8, 64], strides = [1, 1]} : vector<8x512xf32> to vector<8x64xf32>
    %12 = arith.mulf %10, %11 : vector<8x64xf32>
    %13 = arith.addf %9, %12 : vector<8x64xf32>
    %14 = vector.extract_strided_slice %2 {offsets = [0, 192], sizes = [8, 64], strides = [1, 1]} : vector<8x512xf32> to vector<8x64xf32>
    %15 = vector.extract_strided_slice %2 {offsets = [0, 448], sizes = [8, 64], strides = [1, 1]} : vector<8x512xf32> to vector<8x64xf32>
    %16 = arith.mulf %14, %15 : vector<8x64xf32>
    %17 = arith.addf %13, %16 : vector<8x64xf32>
    %18 = arith.truncf %17 : vector<8x64xf32> to vector<8x64xbf16>
    %c0_3 = arith.constant 0 : index
    %c0_4 = arith.constant 0 : index
    %19 = vector.load %arg3[%c0_3, %c0_4] : memref<8x64xbf16, #tpu.memory_space<vmem>>, vector<8x64xbf16>
    tpu.vector_store %arg3[%c0_3, %c0_4], %18 {strides = array<i32>} : memref<8x64xbf16, #tpu.memory_space<vmem>>, vector<8x64xbf16>,
    return
  }
  func.func @transform_0(%arg0: i32) -> (i32, i32) {
    %c0_i32 = arith.constant 0 : i32
    %c0_i32_0 = arith.constant 0 : i32
    return %arg0, %c0_i32 : i32, i32
  }
  func.func @transform_1(%arg0: i32) -> (i32, i32) {
    %c0_i32 = arith.constant 0 : i32
    %c0_i32_0 = arith.constant 0 : i32
    %c0_i32_1 = arith.constant 0 : i32
    return %c0_i32, %c0_i32_0 : i32, i32
  }
  func.func @transform_2(%arg0: i32) -> (i32, i32) {
    %c0_i32 = arith.constant 0 : i32
    %c0_i32_0 = arith.constant 0 : i32
    return %arg0, %c0_i32 : i32, i32
  }
}

</mosaic_0001>

<llo_original>
// kernel: tpu_custom_call.1
$region0: #{tpu_custom_call.1}
  #allocation0 [shape = 'u32[]', space=smem, size = 0x4, offset = 0x4, fixed_abs, tag = 'smem constant byte address 0x4 - core index']
  #allocation1 [shape = 'u32[144,128]{1,0:T(1,128)}', space=vmem, size = 0x12000, scoped, tag = 'internal scratch']
  %s0 = inlined_call_operand.hbm [shape: bf16[8,32], index: 0, kind: input, shape index: {}]
  %s1 = inlined_call_operand.hbm [shape: bf16[32,512], index: 1, kind: input, shape index: {}]
  %s2 = inlined_call_operand.hbm [shape: bf16[8,64], index: 2, kind: output, shape index: {}]
  %s3 = sld [smem:[#allocation0]]
  $region26: #{tpu_custom_call.1} parent=0
    _
  %s5 = ssub.s32 1, %s3
  %s6 = scalar_select 0, %s5, %s3
  $region1: #{tpu_custom_call.1} parent=0
    #allocation2 [shape = 'u8[2048]{0}', space=vmem, size = 0x800, scoped, tag = 'input window, operand 0, single buffered']
    #allocation3 [shape = 's32[1]{0}', space=sflag, size = 0x4, scoped, tag = 'scoped memory for tpu_custom_call.1']
    #allocation4 [shape = 's32[1]{0}', space=sflag, size = 0x4, scoped, tag = 'scoped memory for tpu_custom_call.1']
    #allocation5 [shape = 'u8[32768]{0}', space=vmem, size = 0x8000, scoped, tag = 'input window, operand 1, single buffered']
    #allocation6 [shape = 's32[1]{0}', space=sflag, size = 0x4, scoped, tag = 'scoped memory for tpu_custom_call.1']
    #allocation7 [shape = 'u8[2048]{0}', space=vmem, size = 0x800, scoped, tag = 'output window, operand 0, single buffered']
    %7 = vsyncpa [#allocation3], 0
    %8 = vsyncpa [#allocation6], 0
    %9 = vsyncpa [#allocation4], 0
    // Predicated region
    $region2: #{tpu_custom_call.1} parent=1 // pred_check
      _
    $region3: #{tpu_custom_call.1} parent=1 // pred_check_branch
      %11 = sbr.rel (0) target = $region5
    $region4: #{tpu_custom_call.1} parent=1 // pred_region
      %s13 = ssub.s32 64, 64
      %14 = vsyncadd [#allocation3], %s13
      %s16 = sshll.u32 [#allocation2], 4
      %s17 = int_to_ptr.vmem [resolvable:$true] %s16
      %19 = dma.hbm_to_vmem [thread:$0]  %s0, 64, %s17, [#allocation3]
    $region5: #{tpu_custom_call.1} parent=1 // pred_fallthru
      _
    // Predicated region
    $region6: #{tpu_custom_call.1} parent=1 // pred_check
      _
    $region7: #{tpu_custom_call.1} parent=1 // pred_check_branch
      %21 = sbr.rel (0) target = $region9
    $region8: #{tpu_custom_call.1} parent=1 // pred_region
      %s23 = ssub.s32 1024, 1024
      %24 = vsyncadd [#allocation6], %s23
      %s25 = sshll.u32 [#allocation5], 4
      %s26 = int_to_ptr.vmem [resolvable:$true] %s25
      %31 = dma.hbm_to_vmem [thread:$0]  %s1, 1024, %s26, [#allocation6], 256, 256, 16
    $region9: #{tpu_custom_call.1} parent=1 // pred_fallthru
      _
    // Predicated region
    $region10: #{tpu_custom_call.1} parent=1 // pred_check
      _
    $region11: #{tpu_custom_call.1} parent=1 // pred_check_branch
      %33 = sbr.rel (0) target = $region13
    $region12: #{tpu_custom_call.1} parent=1 // pred_region
      %34 = dma.done [#allocation3], 64
    $region13: #{tpu_custom_call.1} parent=1 // pred_fallthru
      _
    // Predicated region
    $region14: #{tpu_custom_call.1} parent=1 // pred_check
      _
    $region15: #{tpu_custom_call.1} parent=1 // pred_check_branch
      %36 = sbr.rel (0) target = $region17
    $region16: #{tpu_custom_call.1} parent=1 // pred_region
      %37 = dma.done [#allocation6], 1024
    $region17: #{tpu_custom_call.1} parent=1 // pred_fallthru
      _
    %v39 = vld [vmem:[#allocation2] sm:$0xf]
    %v40 = vld [vmem:[#allocation5] sm:$0xff]
    %v41 = vld [vmem:[#allocation5 + $0x8] sm:$0xff]
    %v42 = vld [vmem:[#allocation5 + $0x10] sm:$0xff]
    %v43 = vld [vmem:[#allocation5 + $0x18] sm:$0xff]
    %v44 = vld [vmem:[#allocation5 + $0x20] sm:$0xff]
    %v45 = vld [vmem:[#allocation5 + $0x28] sm:$0xff]
    %v46 = vld [vmem:[#allocation5 + $0x30] sm:$0xff]
    %v47 = vld [vmem:[#allocation5 + $0x38] sm:$0xff]
    %v56 = vunpack.c.l.b16 %v40
    %v57 = vunpack.c.h.b16 %v40
    %v58 = vunpack.c.l.b16 %v41
    %v59 = vunpack.c.h.b16 %v41
    %v60 = vunpack.c.l.b16 %v42
    %v61 = vunpack.c.h.b16 %v42
    %v62 = vunpack.c.l.b16 %v43
    %v63 = vunpack.c.h.b16 %v43
    %v64 = vunpack.c.l.b16 %v44
    %v65 = vunpack.c.h.b16 %v44
    %v66 = vunpack.c.l.b16 %v45
    %v67 = vunpack.c.h.b16 %v45
    %v68 = vunpack.c.l.b16 %v46
    %v69 = vunpack.c.h.b16 %v46
    %v70 = vunpack.c.l.b16 %v47
    %v71 = vunpack.c.h.b16 %v47
    %v72 = vpack.c.b16 %v60, %v56
    %v73 = vpack.c.b16 %v61, %v57
    %v74 = vpack.c.b16 %v62, %v58
    %v75 = vpack.c.b16 %v63, %v59
    %v76 = vpack.c.b16 %v68, %v64
    %v77 = vpack.c.b16 %v69, %v65
    %v78 = vpack.c.b16 %v70, %v66
    %v79 = vpack.c.b16 %v71, %v67
    %vm88 = vcmask 261120
    %v90 = vsel %vm88, %v39, 0
    %92 = vmatprep.subr.bf16.mxu0 %v73
    %93 = vmatpush1.bf16.msra.mxu0 %v72
    %94 = vmatprep.subr.bf16.mxu0 %v77
    %95 = vmatpush1.bf16.msra.mxu0 %v76
    %96 = vmatprep.subr.bf16.mxu0 0
    %97 = vmatpush1.bf16.msra.mxu0 0
    %98 = vmatprep.subr.bf16.mxu0 0
    %99 = vmatpush1.bf16.msra.mxu0 0
    %100 = vmatprep.subr.bf16.mxu0 0
    %101 = vmatpush1.bf16.msra.mxu0 0
    %102 = vmatprep.subr.bf16.mxu0 0
    %103 = vmatpush1.bf16.msra.mxu0 0
    %104 = vmatprep.subr.bf16.mxu0 0
    %105 = vmatpush1.bf16.msra.mxu0 0
    %106 = vmatprep.subr.bf16.mxu0 0
    %107 = vmatpush1.bf16.msra.mxu0 0
    %108 = vmatprep.subr.bf16.mxu0 0
    %109 = vmatpush1.bf16.msra.mxu0 0
    %110 = vmatprep.subr.bf16.mxu0 0
    %111 = vmatpush1.bf16.msra.mxu0 0
    %112 = vmatprep.subr.bf16.mxu0 0
    %113 = vmatpush1.bf16.msra.mxu0 0
    %114 = vmatprep.subr.bf16.mxu0 0
    %115 = vmatpush1.bf16.msra.mxu0 0
    %116 = vmatprep.subr.bf16.mxu0 0
    %117 = vmatpush1.bf16.msra.mxu0 0
    %118 = vmatprep.subr.bf16.mxu0 0
    %119 = vmatpush1.bf16.msra.mxu0 0
    %120 = vmatprep.subr.bf16.mxu0 0
    %121 = vmatpush1.bf16.msra.mxu0 0
    %122 = vmatprep.subr.bf16.mxu0 0
    %123 = vmatpush1.bf16.msra.mxu0 0
    %124 = vmatprep.mubr.bf16.mxu0 0
    %125 = vmatmul.mubr.bf16.gmra.mrb[0].mxu0 %v90
    %v126 = vpop.f32.mrb[0].mxu0
    %v127 = vadd.f32 0.0, %v126
    %v128 = vpop.f32.mrb[0].mxu0
    %v129 = vadd.f32 0.0, %v128
    %v130 = vpop.f32.mrb[0].mxu0
    %v131 = vpop.f32.mrb[0].mxu0
    %132 = vdwg.mxu0
    %133 = vmatprep.subr.bf16.mxu0 %v75
    %134 = vmatpush1.bf16.msra.mxu0 %v74
    %135 = vmatprep.subr.bf16.mxu0 %v79
    %136 = vmatpush1.bf16.msra.mxu0 %v78
    %137 = vmatprep.subr.bf16.mxu0 0
    %138 = vmatpush1.bf16.msra.mxu0 0
    %139 = vmatprep.subr.bf16.mxu0 0
    %140 = vmatpush1.bf16.msra.mxu0 0
    %141 = vmatprep.subr.bf16.mxu0 0
    %142 = vmatpush1.bf16.msra.mxu0 0
    %143 = vmatprep.subr.bf16.mxu0 0
    %144 = vmatpush1.bf16.msra.mxu0 0
    %145 = vmatprep.subr.bf16.mxu0 0
    %146 = vmatpush1.bf16.msra.mxu0 0
    %147 = vmatprep.subr.bf16.mxu0 0
    %148 = vmatpush1.bf16.msra.mxu0 0
    %149 = vmatprep.subr.bf16.mxu0 0
    %150 = vmatpush1.bf16.msra.mxu0 0
    %151 = vmatprep.subr.bf16.mxu0 0
    %152 = vmatpush1.bf16.msra.mxu0 0
    %153 = vmatprep.subr.bf16.mxu0 0
    %154 = vmatpush1.bf16.msra.mxu0 0
    %155 = vmatprep.subr.bf16.mxu0 0
    %156 = vmatpush1.bf16.msra.mxu0 0
    %157 = vmatprep.subr.bf16.mxu0 0
    %158 = vmatpush1.bf16.msra.mxu0 0
    %159 = vmatprep.subr.bf16.mxu0 0
    %160 = vmatpush1.bf16.msra.mxu0 0
    %161 = vmatprep.subr.bf16.mxu0 0
    %162 = vmatpush1.bf16.msra.mxu0 0
    %163 = vmatprep.subr.bf16.mxu0 0
    %164 = vmatpush1.bf16.msra.mxu0 0
    %165 = vmatprep.mubr.bf16.mxu0 0
    %166 = vmatmul.mubr.bf16.gmra.mrb[0].mxu0 %v90
    %v167 = vpop.f32.mrb[0].mxu0
    %v168 = vadd.f32 0.0, %v167
    %v169 = vpop.f32.mrb[0].mxu0
    %v170 = vadd.f32 0.0, %v169
    %v171 = vpop.f32.mrb[0].mxu0
    %v172 = vpop.f32.mrb[0].mxu0
    %173 = vdwg.mxu0
    %v174 = vmul.f32 %v127, %v168
    %176 = vrot.lane.b32.xlu0 %v174, 64
    %v177 = vpop.permute.xlu0 %176
    %v179 = vadd.f32 %v174, %v177
    %v180 = vmul.f32 %v129, %v170
    %v181 = vadd.f32 %v179, %v180
    %183 = vrot.lane.b32.xlu0 %v180, 64
    %v184 = vpop.permute.xlu0 %183
    %v186 = vadd.f32 %v181, %v184
    %v187 = vpack.c.bf16 %v186, %v186
    %vm188 = vcmask 519168
    %189 = vst.msk [vmem:[#allocation7] sm:$0xf] %vm188, %v187
    // Predicated region
    $region18: #{tpu_custom_call.1} parent=1 // pred_check
      _
    $region19: #{tpu_custom_call.1} parent=1 // pred_check_branch
      %191 = sbr.rel (0) target = $region21
    $region20: #{tpu_custom_call.1} parent=1 // pred_region
      %s193 = ssub.s32 64, 64
      %194 = vsyncadd [#allocation4], %s193
      %s196 = sshll.u32 [#allocation7], 4
      %s197 = int_to_ptr.vmem [resolvable:$true] %s196
      %199 = dma.vmem_to_hbm [thread:$0]  %s197, 64, %s2, [#allocation4]
    $region21: #{tpu_custom_call.1} parent=1 // pred_fallthru
      _
    // Predicated region
    $region22: #{tpu_custom_call.1} parent=1 // pred_check
      _
    $region23: #{tpu_custom_call.1} parent=1 // pred_check_branch
      %201 = sbr.rel (0) target = $region25
    $region24: #{tpu_custom_call.1} parent=1 // pred_region
      %202 = dma.done [#allocation4], 64
    $region25: #{tpu_custom_call.1} parent=1 // pred_fallthru
      _
    %203 = vsyncpa [#allocation3], 1
    %204 = vsyncpa [#allocation6], 1
    %205 = vsyncpa [#allocation4], 1

</llo_original>
